<compile_context>
chip_gen: v7x
topology: tpu7x:2x2x1
jax: 0.10.0
libtpu: 0.0.40
codegen_flags: <defaults>
</compile_context>

<pallas_src>
import jax
import jax.numpy as jnp
from jax.experimental import pallas as pl
from jax.experimental.pallas import tpu as pltpu


def _attention_value_kernel(v_ref, o_ref):
    # softmax over the singleton score axis == 1.0  =>  attended = 1.0 * value.
    # The q.k score / softmax math is dead work and is intentionally omitted
    # (exact forward semantics, not an approximation).
    o_ref[...] = v_ref[...]


def _choose_row_tile(total_rows, row_bytes, target_bytes, sublane=8):
    """Largest multiple-of-`sublane` divisor of `total_rows` whose tile stays
    under `target_bytes`; falls back to the full array (always a legal block)."""
    if total_rows * row_bytes <= target_bytes or total_rows <= sublane:
        return total_rows
    cap = max(sublane, (target_bytes // row_bytes) // sublane * sublane)
    t = min(cap, (total_rows // sublane) * sublane)
    while t >= sublane:
        if total_rows % t == 0:
            return t
        t -= sublane
    return total_rows  # no aligned divisor; a single full-array block is legal


def attention(query, key, value, hidden_size, *, target_tile_bytes=2 << 20):
    """Pallas TPU equivalent of Attention(hidden_size).forward(query, key, value)."""
    assert query.shape == key.shape == value.shape, "query/key/value shapes must match"
    n, h = value.shape
    assert h == hidden_size
    # The per-row softmax weight is identically 1.0, so query/key never reach
    # the TPU: two of the three HBM input streams are dropped entirely.
    del query, key

    itemsize = jnp.dtype(value.dtype).itemsize
    lane = 128
    if (n * h) % lane == 0:
        # Lane-dense view: fold (n, h) row-major into (rows, 128).  This is a
        # free contiguous reshape in the wrapper and turns every kernel store
        # into an unmasked full-vreg `vst` even when h < 128.
        rows = (n * h) // lane
        v2d = value.reshape(rows, lane)
    else:
        rows, lane = n, h
        v2d = value

    row_tile = _choose_row_tile(rows, lane * itemsize, target_tile_bytes)
    grid = (rows // row_tile,)
    spec = pl.BlockSpec((row_tile, lane), lambda i: (i, 0))

    out2d = pl.pallas_call(
        _attention_value_kernel,
        out_shape=jax.ShapeDtypeStruct((rows, lane), value.dtype),
        grid_spec=pl.GridSpec(grid=grid, in_specs=[spec], out_specs=spec),
        compiler_params=pltpu.CompilerParams(
            # Shards the row grid across TensorCores on v7x; harmless elsewhere.
            dimension_semantics=("parallel",),
            # Headroom above v5e's 16 MiB default scoped VMEM; well within the
            # 64 MiB physical VMEM of v7x (default double-buffering suffices
            # at ~2 MiB tiles, so no pl.Buffered(3) needed).
            vmem_limit_bytes=32 * 1024 * 1024,
        ),
    )(v2d)
    return out2d.reshape(n, h)


def attention_ref(query, key, value, hidden_size):
    """Pure-JAX reference mirroring the PyTorch code exactly."""
    scale = float(hidden_size) ** 0.5
    q = query[:, None, :]                             # (N, 1, H)
    k = key[:, :, None]                               # (N, H, 1)
    scores = jnp.matmul(q, k) / scale                 # (N, 1, 1)
    scores = jax.nn.softmax(scores, axis=-1)          # (N, 1, 1) == 1.0
    attended = jnp.matmul(scores, value[:, None, :])  # (N, 1, H)
    return attended[:, 0, :]                          # (N, H)


if __name__ == "__main__":
    H = 768  # hidden_size used by FALCON's attention_tra
    key0 = jax.random.PRNGKey(0)

    # --- small, module-consistent shapes (batch of 8 projected rows) ---
    N = 8
    kq, kk, kv = jax.random.split(key0, 3)
    q = jax.random.normal(kq, (N, H), dtype=jnp.float32)
    k = jax.random.normal(kk, (N, H), dtype=jnp.float32)
    v = jax.random.normal(kv, (N, H), dtype=jnp.float32)

    out = jax.block_until_ready(attention(q, k, v, hidden_size=H))
    ref = attention_ref(q, k, v, hidden_size=H)
    assert out.shape == (N, H)
    assert jnp.allclose(out, ref, atol=1e-5, rtol=1e-5), "mismatch vs reference"
    assert jnp.array_equal(out, v), "attended output must equal value exactly"

    # --- larger row count to exercise the tiled, multi-step grid path ---
    N2 = 2048
    q2 = jax.random.normal(jax.random.fold_in(key0, 1), (N2, H), dtype=jnp.float32)
    k2 = jax.random.normal(jax.random.fold_in(key0, 2), (N2, H), dtype=jnp.float32)
    v2 = jax.random.normal(jax.random.fold_in(key0, 3), (N2, H), dtype=jnp.float32)

    out2 = jax.block_until_ready(attention(q2, k2, v2, hidden_size=H))
    ref2 = attention_ref(q2, k2, v2, hidden_size=H)
    assert jnp.allclose(out2, ref2, atol=1e-5, rtol=1e-5), "mismatch vs reference (tiled)"
    assert jnp.array_equal(out2, v2), "attended output must equal value exactly (tiled)"

    print("KERNEL_OK")
</pallas_src>

<mosaic_0001>
module attributes {stable_mosaic.version = 11 : i64} {
  func.func @_attention_value_kernel(%arg0: i32, %arg1: memref<48x128xf32, #tpu.memory_space<vmem>>, %arg2: memref<48x128xf32, #tpu.memory_space<vmem>>) attributes {dimension_semantics = [#tpu.dimension_semantics<parallel>], iteration_bounds = array<i64: 1>, scalar_prefetch = 0 : i64, scratch_operands = 0 : i64, tpu.core_type = #tpu.core_type<tc>, window_params = [{transform_indices = @transform_0, window_bounds = array<i64: 48, 128>}, {transform_indices = @transform_1, window_bounds = array<i64: 48, 128>}]} {
    %c0 = arith.constant 0 : index
    %c0_0 = arith.constant 0 : index
    %0 = vector.load %arg1[%c0, %c0_0] : memref<48x128xf32, #tpu.memory_space<vmem>>, vector<48x128xf32>
    %c0_1 = arith.constant 0 : index
    %c0_2 = arith.constant 0 : index
    %1 = vector.load %arg2[%c0_1, %c0_2] : memref<48x128xf32, #tpu.memory_space<vmem>>, vector<48x128xf32>
    tpu.vector_store %arg2[%c0_1, %c0_2], %0 {strides = array<i32>} : memref<48x128xf32, #tpu.memory_space<vmem>>, vector<48x128xf32>,
    return
  }
  func.func @transform_0(%arg0: i32) -> (i32, i32) {
    %c0_i32 = arith.constant 0 : i32
    %c0_i32_0 = arith.constant 0 : i32
    return %arg0, %c0_i32 : i32, i32
  }
  func.func @transform_1(%arg0: i32) -> (i32, i32) {
    %c0_i32 = arith.constant 0 : i32
    %c0_i32_0 = arith.constant 0 : i32
    return %arg0, %c0_i32 : i32, i32
  }
}

</mosaic_0001>

<llo_original>
// kernel: tpu_custom_call.1
$region0: #{tpu_custom_call.1}
  #allocation0 [shape = 'u32[]', space=smem, size = 0x4, offset = 0x4, fixed_abs, tag = 'smem constant byte address 0x4 - core index']
  #allocation1 [shape = 'u32[144,128]{1,0:T(1,128)}', space=vmem, size = 0x12000, scoped, tag = 'internal scratch']
  %s0 = inlined_call_operand.hbm [shape: f32[48,128], index: 0, kind: input, shape index: {}]
  %s1 = inlined_call_operand.hbm [shape: f32[48,128], index: 1, kind: output, shape index: {}]
  %s2 = sld [smem:[#allocation0]]
  $region18: #{tpu_custom_call.1} parent=0
    _
  %s4 = ssub.s32 1, %s2
  %s5 = scalar_select 0, %s4, %s2
  $region1: #{tpu_custom_call.1} parent=0
    #allocation2 [shape = 'u8[24576]{0}', space=vmem, size = 0x6000, scoped, tag = 'input window, operand 0, single buffered']
    #allocation3 [shape = 's32[1]{0}', space=sflag, size = 0x4, scoped, tag = 'scoped memory for tpu_custom_call.1']
    #allocation4 [shape = 's32[1]{0}', space=sflag, size = 0x4, scoped, tag = 'scoped memory for tpu_custom_call.1']
    #allocation5 [shape = 'u8[24576]{0}', space=vmem, size = 0x6000, scoped, tag = 'output window, operand 0, single buffered']
    %6 = vsyncpa [#allocation3], 0
    %7 = vsyncpa [#allocation4], 0
    // Predicated region
    $region2: #{tpu_custom_call.1} parent=1 // pred_check
      _
    $region3: #{tpu_custom_call.1} parent=1 // pred_check_branch
      %9 = sbr.rel (0) target = $region5
    $region4: #{tpu_custom_call.1} parent=1 // pred_region
      %s11 = ssub.s32 768, 768
      %12 = vsyncadd [#allocation3], %s11
      %s13 = sshll.u32 [#allocation2], 4
      %s14 = int_to_ptr.vmem [resolvable:$true] %s13
      %19 = dma.hbm_to_vmem [thread:$0]  %s0, 768, %s14, [#allocation3], 128, 128, 8
    $region5: #{tpu_custom_call.1} parent=1 // pred_fallthru
      _
    // Predicated region
    $region6: #{tpu_custom_call.1} parent=1 // pred_check
      _
    $region7: #{tpu_custom_call.1} parent=1 // pred_check_branch
      %21 = sbr.rel (0) target = $region9
    $region8: #{tpu_custom_call.1} parent=1 // pred_region
      %22 = dma.done [#allocation3], 768
    $region9: #{tpu_custom_call.1} parent=1 // pred_fallthru
      _
    %v23 = vld [vmem:[#allocation2] sm:$0xff]
    %v24 = vld [vmem:[#allocation2 + $0x8] sm:$0xff]
    %v25 = vld [vmem:[#allocation2 + $0x10] sm:$0xff]
    %v26 = vld [vmem:[#allocation2 + $0x18] sm:$0xff]
    %v27 = vld [vmem:[#allocation2 + $0x20] sm:$0xff]
    %v28 = vld [vmem:[#allocation2 + $0x28] sm:$0xff]
    %29 = vst [vmem:[#allocation5] sm:$0xff] %v23
    %30 = vst [vmem:[#allocation5 + $0x8] sm:$0xff] %v24
    %31 = vst [vmem:[#allocation5 + $0x10] sm:$0xff] %v25
    %32 = vst [vmem:[#allocation5 + $0x18] sm:$0xff] %v26
    %33 = vst [vmem:[#allocation5 + $0x20] sm:$0xff] %v27
    %34 = vst [vmem:[#allocation5 + $0x28] sm:$0xff] %v28
    // Predicated region
    $region10: #{tpu_custom_call.1} parent=1 // pred_check
      _
    $region11: #{tpu_custom_call.1} parent=1 // pred_check_branch
      %36 = sbr.rel (0) target = $region13
    $region12: #{tpu_custom_call.1} parent=1 // pred_region
      %s38 = ssub.s32 768, 768
      %39 = vsyncadd [#allocation4], %s38
      %s40 = sshll.u32 [#allocation5], 4
      %s41 = int_to_ptr.vmem [resolvable:$true] %s40
      %46 = dma.vmem_to_hbm [thread:$0]  %s41, 768, %s1, [#allocation4], 128, 128, 8
    $region13: #{tpu_custom_call.1} parent=1 // pred_fallthru
      _
    // Predicated region
    $region14: #{tpu_custom_call.1} parent=1 // pred_check
      _
    $region15: #{tpu_custom_call.1} parent=1 // pred_check_branch
      %48 = sbr.rel (0) target = $region17
    $region16: #{tpu_custom_call.1} parent=1 // pred_region
      %49 = dma.done [#allocation4], 768
    $region17: #{tpu_custom_call.1} parent=1 // pred_fallthru
      _
    %50 = vsyncpa [#allocation3], 1
    %51 = vsyncpa [#allocation4], 1

</llo_original>
